<compile_context>
chip_gen: v6e
topology: v6e:2x2x1
jax: 0.10.0
libtpu: 0.0.40
codegen_flags: <defaults>
</compile_context>

<pallas_src>
import functools
import math

import jax
import jax.numpy as jnp
from jax.experimental import pallas as pl
from jax.experimental.pallas import tpu as pltpu


def _round_up(a, b):
    return (a + b - 1) // b * b


def _dice_kernel(x_ref, y_ref, o_ref, sx_acc, sy_acc, sxy_acc, *,
                 smooth, n_classes, y_is_labels):
    """Grid = (batch, spatial_chunk). Accumulate sum_x / sum_y / sum_xy over
    the spatial axis, then form dice = (2*sxy + s) / (sx + sy + s) since
    2*tp + fp + fn == sum_x + sum_y."""
    k = pl.program_id(1)

    @pl.when(k == 0)
    def _():
        sx_acc[...] = jnp.zeros_like(sx_acc)
        sy_acc[...] = jnp.zeros_like(sy_acc)
        sxy_acc[...] = jnp.zeros_like(sxy_acc)

    x = x_ref[...].astype(jnp.float32)                       # (1, C, tile)

    if y_is_labels:
        lab = y_ref[...]                                     # (1, 1, tile) i32
        cls = jax.lax.broadcasted_iota(
            jnp.int32, (1, n_classes, x.shape[-1]), 1)       # (1, C, tile)
        yoh = lab == cls                                     # in-kernel one-hot
        yf = yoh.astype(jnp.float32)
        xy = jnp.where(yoh, x, 0.0)
    else:                                                    # y given one-hot/soft
        yf = y_ref[...].astype(jnp.float32)                  # (1, C, tile)
        xy = x * yf

    sx_acc[...] += jnp.sum(x, axis=2, keepdims=True)         # (1, C, 1)
    sy_acc[...] += jnp.sum(yf, axis=2, keepdims=True)
    sxy_acc[...] += jnp.sum(xy, axis=2, keepdims=True)

    @pl.when(k == pl.num_programs(1) - 1)
    def _():
        sx = sx_acc[...]
        sy = sy_acc[...]
        sxy = sxy_acc[...]
        # tp = sxy, fp = sx - sxy, fn = sy - sxy  =>  2tp + fp + fn = sx + sy
        o_ref[...] = (2.0 * sxy + smooth) / (sx + sy + smooth)


def soft_dice_loss(x, y, smooth=1.0):
    """SoftDiceLoss.forward with defaults (batch_dice=False, do_bg=True,
    apply_nonlin=None).  x: (B, C, *spatial); y: label map (B, *spatial) /
    (B, 1, *spatial) or one-hot / soft target with x's shape."""
    B, C = x.shape[0], x.shape[1]
    spatial = x.shape[2:]
    HW = math.prod(spatial)

    # Keep x in its native dtype (no wrapper-side f32 copy); cast in-kernel.
    xf = x.reshape(B, C, HW)
    x_item = xf.dtype.itemsize

    if y.shape == x.shape:
        # Already one-hot (or soft) encoded target.
        y_is_labels = False
        yk = y.reshape(B, C, HW)
        y_row_bytes = C * yk.dtype.itemsize
    else:
        # Label map: (B, *spatial) or (B, 1, *spatial) -> one-hot built in-kernel.
        y_is_labels = True
        if y.ndim == x.ndim:
            y = y.reshape(B, *spatial)          # drop the singleton channel
        yk = y.reshape(B, 1, HW).astype(jnp.int32)
        y_row_bytes = 4

    # --- spatial tile selection from a conservative VMEM budget -------------
    # Double-buffered streamed inputs per grid step:
    #   x block: C * tile * x_item, y block: tile * y_row_bytes (labels)
    hw128 = _round_up(HW, 128)
    budget = 8 * 1024 * 1024                     # bytes for streamed buffers
    per_lane = 2 * (C * x_item + y_row_bytes)    # x2 for double buffering
    tile_cap = max(128, (budget // per_lane) // 128 * 128)
    nk = -(-hw128 // tile_cap)                   # number of spatial chunks
    tile = _round_up(-(-hw128 // nk), 128)       # lane-aligned chunk size
    HWp = tile * nk

    if HWp != HW:
        # Zero-padding is exact: padded x = 0 and padded one-hot = 0 (label -1
        # never matches a class), so every accumulated sum is unchanged.
        pad = HWp - HW
        xf = jnp.pad(xf, ((0, 0), (0, 0), (0, pad)))
        pad_val = -1 if y_is_labels else 0
        yk = jnp.pad(yk, ((0, 0), (0, 0), (0, pad)), constant_values=pad_val)

    y_block = (1, 1, tile) if y_is_labels else (1, C, tile)

    dc = pl.pallas_call(
        functools.partial(_dice_kernel, smooth=float(smooth),
                          n_classes=C, y_is_labels=y_is_labels),
        out_shape=jax.ShapeDtypeStruct((B, C, 1), jnp.float32),
        grid_spec=pltpu.PrefetchScalarGridSpec(
            num_scalar_prefetch=0,
            grid=(B, HWp // tile),
            in_specs=[
                pl.BlockSpec((1, C, tile), lambda b, k: (b, 0, k)),
                pl.BlockSpec(y_block, lambda b, k: (b, 0, k)),
            ],
            out_specs=pl.BlockSpec((1, C, 1), lambda b, k: (b, 0, 0)),
            scratch_shapes=[
                pltpu.VMEM((1, C, 1), jnp.float32),  # sum_x
                pltpu.VMEM((1, C, 1), jnp.float32),  # sum_y
                pltpu.VMEM((1, C, 1), jnp.float32),  # sum_xy
            ],
        ),
        compiler_params=pltpu.CompilerParams(
            dimension_semantics=("parallel", "arbitrary"),
            vmem_limit_bytes=32 * 1024 * 1024,
        ),
    )(xf, yk)

    # TODO(synk): non-default module options (loss_mask, batch_dice=True,
    # do_bg=False, apply_nonlin) are out of scope; defaults only.
    return -jnp.mean(dc)


def _reference_soft_dice(x, y_onehot, smooth=1.0):
    # Pure-JAX reference of the PyTorch forward (batch_dice=False, do_bg=True).
    tp = jnp.sum(x * y_onehot, axis=(2, 3))
    fp = jnp.sum(x * (1 - y_onehot), axis=(2, 3))
    fn = jnp.sum((1 - x) * y_onehot, axis=(2, 3))
    dc = (2 * tp + smooth) / (2 * tp + fp + fn + smooth)
    return -jnp.mean(dc)


if __name__ == "__main__":
    key = jax.random.PRNGKey(0)
    kx, ky = jax.random.split(key)

    B, C, H, W = 2, 4, 16, 16
    # net output (e.g. post-softmax probabilities in [0, 1])
    x = jax.nn.softmax(jax.random.normal(kx, (B, C, H, W), jnp.float32), axis=1)
    # ground-truth label map (b, x, y) -> one-hot encoded inside the kernel
    y = jax.random.randint(ky, (B, H, W), 0, C, jnp.int32)

    loss = soft_dice_loss(x, y, smooth=1.0)
    loss = jax.block_until_ready(loss)

    ref = _reference_soft_dice(
        x, jax.nn.one_hot(y, C, axis=1, dtype=jnp.float32), smooth=1.0)
    assert jnp.allclose(loss, ref, atol=1e-5, rtol=1e-5), (loss, ref)

    # also exercise the "y already one-hot" path
    loss2 = soft_dice_loss(
        x, jax.nn.one_hot(y, C, axis=1, dtype=jnp.float32), smooth=1.0)
    loss2 = jax.block_until_ready(loss2)
    assert jnp.allclose(loss2, ref, atol=1e-5, rtol=1e-5), (loss2, ref)

    print("KERNEL_OK")
</pallas_src>

<mosaic_0001>
module attributes {stable_mosaic.version = 11 : i64} {
  func.func @_dice_kernel(%arg0: i32, %arg1: i32, %arg2: memref<1x4x256xf32, #tpu.memory_space<vmem>>, %arg3: memref<1x1x256xi32, #tpu.memory_space<vmem>>, %arg4: memref<1x4x1xf32, #tpu.memory_space<vmem>>, %arg5: memref<1x4x1xf32, #tpu.memory_space<vmem>>, %arg6: memref<1x4x1xf32, #tpu.memory_space<vmem>>, %arg7: memref<1x4x1xf32, #tpu.memory_space<vmem>>) attributes {dimension_semantics = [#tpu.dimension_semantics<parallel>, #tpu.dimension_semantics<arbitrary>], iteration_bounds = array<i64: 2, 1>, scalar_prefetch = 0 : i64, scratch_operands = 3 : i64, tpu.core_type = #tpu.core_type<tc>, window_params = [{transform_indices = @transform_0, window_bounds = array<i64: 1, 4, 256>}, {transform_indices = @transform_1, window_bounds = array<i64: 1, 1, 256>}, {transform_indices = @transform_2, window_bounds = array<i64: 1, 4, 1>}]} {
    %c0_i32 = arith.constant 0 : i32
    %0 = arith.cmpi eq, %arg1, %c0_i32 : i32
    %1 = arith.extui %0 : i1 to i32
    %c0_i32_0 = arith.constant 0 : i32
    %2 = arith.cmpi ne, %1, %c0_i32_0 : i32
    scf.if %2 {
      %cst_29 = arith.constant 0.000000e+00 : f32
      %30 = vector.broadcast %cst_29 : f32 to vector<1x4x1xf32>
      %c0_30 = arith.constant 0 : index
      %c0_31 = arith.constant 0 : index
      %c0_32 = arith.constant 0 : index
      %31 = vector.load %arg5[%c0_30, %c0_31, %c0_32] : memref<1x4x1xf32, #tpu.memory_space<vmem>>, vector<1x4x1xf32>
      tpu.vector_store %arg5[%c0_30, %c0_31, %c0_32], %30 {strides = array<i32>} : memref<1x4x1xf32, #tpu.memory_space<vmem>>, vector<1x4x1xf32>,
      %cst_33 = arith.constant 0.000000e+00 : f32
      %32 = vector.broadcast %cst_33 : f32 to vector<1x4x1xf32>
      %c0_34 = arith.constant 0 : index
      %c0_35 = arith.constant 0 : index
      %c0_36 = arith.constant 0 : index
      %33 = vector.load %arg6[%c0_34, %c0_35, %c0_36] : memref<1x4x1xf32, #tpu.memory_space<vmem>>, vector<1x4x1xf32>
      tpu.vector_store %arg6[%c0_34, %c0_35, %c0_36], %32 {strides = array<i32>} : memref<1x4x1xf32, #tpu.memory_space<vmem>>, vector<1x4x1xf32>,
      %cst_37 = arith.constant 0.000000e+00 : f32
      %34 = vector.broadcast %cst_37 : f32 to vector<1x4x1xf32>
      %c0_38 = arith.constant 0 : index
      %c0_39 = arith.constant 0 : index
      %c0_40 = arith.constant 0 : index
      %35 = vector.load %arg7[%c0_38, %c0_39, %c0_40] : memref<1x4x1xf32, #tpu.memory_space<vmem>>, vector<1x4x1xf32>
      tpu.vector_store %arg7[%c0_38, %c0_39, %c0_40], %34 {strides = array<i32>} : memref<1x4x1xf32, #tpu.memory_space<vmem>>, vector<1x4x1xf32>,
    } else {
    }
    %c0 = arith.constant 0 : index
    %c0_1 = arith.constant 0 : index
    %c0_2 = arith.constant 0 : index
    %3 = vector.load %arg2[%c0, %c0_1, %c0_2] : memref<1x4x256xf32, #tpu.memory_space<vmem>>, vector<1x4x256xf32>
    %c0_3 = arith.constant 0 : index
    %c0_4 = arith.constant 0 : index
    %c0_5 = arith.constant 0 : index
    %4 = vector.load %arg3[%c0_3, %c0_4, %c0_5] : memref<1x1x256xi32, #tpu.memory_space<vmem>>, vector<1x1x256xi32>
    %5 = tpu.iota {dimensions = array<i32: 1>} : vector<1x4x256xi32>
    %6 = vector.broadcast %4 : vector<1x1x256xi32> to vector<1x4x256xi32>
    %7 = arith.cmpi eq, %6, %5 : vector<1x4x256xi32>
    %8 = arith.extui %7 : vector<1x4x256xi1> to vector<1x4x256xi32>
    %9 = arith.sitofp %8 : vector<1x4x256xi32> to vector<1x4x256xf32>
    %cst = arith.constant 0.000000e+00 : f32
    %10 = vector.broadcast %cst : f32 to vector<1x4x256xf32>
    %11 = arith.select %7, %3, %10 : vector<1x4x256xi1>, vector<1x4x256xf32>
    %c0_6 = arith.constant 0 : index
    %c0_7 = arith.constant 0 : index
    %c0_8 = arith.constant 0 : index
    %12 = vector.load %arg5[%c0_6, %c0_7, %c0_8] : memref<1x4x1xf32, #tpu.memory_space<vmem>>, vector<1x4x1xf32>
    %cst_9 = arith.constant dense<0.000000e+00> : vector<1x4xf32>
    %13 = vector.multi_reduction <add>, %3, %cst_9 [2] : vector<1x4x256xf32> to vector<1x4xf32>
    %14 = vector.shape_cast %13 : vector<1x4xf32> to vector<1x4x1xf32>
    %15 = arith.addf %12, %14 : vector<1x4x1xf32>
    %c0_10 = arith.constant 0 : index
    %c0_11 = arith.constant 0 : index
    %c0_12 = arith.constant 0 : index
    %16 = vector.load %arg5[%c0_10, %c0_11, %c0_12] : memref<1x4x1xf32, #tpu.memory_space<vmem>>, vector<1x4x1xf32>
    tpu.vector_store %arg5[%c0_10, %c0_11, %c0_12], %15 {strides = array<i32>} : memref<1x4x1xf32, #tpu.memory_space<vmem>>, vector<1x4x1xf32>,
    %c0_13 = arith.constant 0 : index
    %c0_14 = arith.constant 0 : index
    %c0_15 = arith.constant 0 : index
    %17 = vector.load %arg6[%c0_13, %c0_14, %c0_15] : memref<1x4x1xf32, #tpu.memory_space<vmem>>, vector<1x4x1xf32>
    %cst_16 = arith.constant dense<0.000000e+00> : vector<1x4xf32>
    %18 = vector.multi_reduction <add>, %9, %cst_16 [2] : vector<1x4x256xf32> to vector<1x4xf32>
    %19 = vector.shape_cast %18 : vector<1x4xf32> to vector<1x4x1xf32>
    %20 = arith.addf %17, %19 : vector<1x4x1xf32>
    %c0_17 = arith.constant 0 : index
    %c0_18 = arith.constant 0 : index
    %c0_19 = arith.constant 0 : index
    %21 = vector.load %arg6[%c0_17, %c0_18, %c0_19] : memref<1x4x1xf32, #tpu.memory_space<vmem>>, vector<1x4x1xf32>
    tpu.vector_store %arg6[%c0_17, %c0_18, %c0_19], %20 {strides = array<i32>} : memref<1x4x1xf32, #tpu.memory_space<vmem>>, vector<1x4x1xf32>,
    %c0_20 = arith.constant 0 : index
    %c0_21 = arith.constant 0 : index
    %c0_22 = arith.constant 0 : index
    %22 = vector.load %arg7[%c0_20, %c0_21, %c0_22] : memref<1x4x1xf32, #tpu.memory_space<vmem>>, vector<1x4x1xf32>
    %cst_23 = arith.constant dense<0.000000e+00> : vector<1x4xf32>
    %23 = vector.multi_reduction <add>, %11, %cst_23 [2] : vector<1x4x256xf32> to vector<1x4xf32>
    %24 = vector.shape_cast %23 : vector<1x4xf32> to vector<1x4x1xf32>
    %25 = arith.addf %22, %24 : vector<1x4x1xf32>
    %c0_24 = arith.constant 0 : index
    %c0_25 = arith.constant 0 : index
    %c0_26 = arith.constant 0 : index
    %26 = vector.load %arg7[%c0_24, %c0_25, %c0_26] : memref<1x4x1xf32, #tpu.memory_space<vmem>>, vector<1x4x1xf32>
    tpu.vector_store %arg7[%c0_24, %c0_25, %c0_26], %25 {strides = array<i32>} : memref<1x4x1xf32, #tpu.memory_space<vmem>>, vector<1x4x1xf32>,
    %c0_i32_27 = arith.constant 0 : i32
    %27 = arith.cmpi eq, %arg1, %c0_i32_27 : i32
    %28 = arith.extui %27 : i1 to i32
    %c0_i32_28 = arith.constant 0 : i32
    %29 = arith.cmpi ne, %28, %c0_i32_28 : i32
    scf.if %29 {
      %c0_29 = arith.constant 0 : index
      %c0_30 = arith.constant 0 : index
      %c0_31 = arith.constant 0 : index
      %30 = vector.load %arg5[%c0_29, %c0_30, %c0_31] : memref<1x4x1xf32, #tpu.memory_space<vmem>>, vector<1x4x1xf32>
      %c0_32 = arith.constant 0 : index
      %c0_33 = arith.constant 0 : index
      %c0_34 = arith.constant 0 : index
      %31 = vector.load %arg6[%c0_32, %c0_33, %c0_34] : memref<1x4x1xf32, #tpu.memory_space<vmem>>, vector<1x4x1xf32>
      %c0_35 = arith.constant 0 : index
      %c0_36 = arith.constant 0 : index
      %c0_37 = arith.constant 0 : index
      %32 = vector.load %arg7[%c0_35, %c0_36, %c0_37] : memref<1x4x1xf32, #tpu.memory_space<vmem>>, vector<1x4x1xf32>
      %cst_38 = arith.constant 2.000000e+00 : f32
      %33 = vector.broadcast %cst_38 : f32 to vector<1x4x1xf32>
      %34 = arith.mulf %33, %32 : vector<1x4x1xf32>
      %cst_39 = arith.constant 1.000000e+00 : f32
      %35 = vector.broadcast %cst_39 : f32 to vector<1x4x1xf32>
      %36 = arith.addf %34, %35 : vector<1x4x1xf32>
      %37 = arith.addf %30, %31 : vector<1x4x1xf32>
      %cst_40 = arith.constant 1.000000e+00 : f32
      %38 = vector.broadcast %cst_40 : f32 to vector<1x4x1xf32>
      %39 = arith.addf %37, %38 : vector<1x4x1xf32>
      %40 = arith.divf %36, %39 : vector<1x4x1xf32>
      %c0_41 = arith.constant 0 : index
      %c0_42 = arith.constant 0 : index
      %c0_43 = arith.constant 0 : index
      %41 = vector.load %arg4[%c0_41, %c0_42, %c0_43] : memref<1x4x1xf32, #tpu.memory_space<vmem>>, vector<1x4x1xf32>
      tpu.vector_store %arg4[%c0_41, %c0_42, %c0_43], %40 {strides = array<i32>} : memref<1x4x1xf32, #tpu.memory_space<vmem>>, vector<1x4x1xf32>,
    } else {
    }
    return
  }
  func.func @transform_0(%arg0: i32, %arg1: i32) -> (i32, i32, i32) {
    %c0_i32 = arith.constant 0 : i32
    %c0_i32_0 = arith.constant 0 : i32
    return %arg0, %c0_i32, %arg1 : i32, i32, i32
  }
  func.func @transform_1(%arg0: i32, %arg1: i32) -> (i32, i32, i32) {
    %c0_i32 = arith.constant 0 : i32
    %c0_i32_0 = arith.constant 0 : i32
    return %arg0, %c0_i32, %arg1 : i32, i32, i32
  }
  func.func @transform_2(%arg0: i32, %arg1: i32) -> (i32, i32, i32) {
    %c0_i32 = arith.constant 0 : i32
    %c0_i32_0 = arith.constant 0 : i32
    %c0_i32_1 = arith.constant 0 : i32
    return %arg0, %c0_i32, %c0_i32_0 : i32, i32, i32
  }
}

</mosaic_0001>

<llo_original>
// kernel: tpu_custom_call.1
$region0: #{tpu_custom_call.1}
  #allocation0 [shape = 'u32[]', space=smem, size = 0x4, offset = 0x4, fixed_abs, tag = 'smem constant byte address 0x4 - core index']
  #allocation1 [shape = 'u32[144,128]{1,0:T(1,128)}', space=vmem, size = 0x12000, scoped, tag = 'internal scratch']
  #allocation2 [shape = 'f32[1,4,1]{2,1,0:T(4,128)}', space=vmem, size = 0x800, scoped, tag = 'scratch operand']
  #allocation3 [shape = 'f32[1,4,1]{2,1,0:T(4,128)}', space=vmem, size = 0x800, scoped, tag = 'scratch operand']
  #allocation4 [shape = 'f32[1,4,1]{2,1,0:T(4,128)}', space=vmem, size = 0x800, scoped, tag = 'scratch operand']
  %s0 = inlined_call_operand.hbm [shape: f32[2,4,256], index: 0, kind: input, shape index: {}]
  %s1 = inlined_call_operand.hbm [shape: s32[2,1,256], index: 1, kind: input, shape index: {}]
  %s2 = inlined_call_operand.vmem [shape: f32[2,4,1], index: 2, kind: output, shape index: {}]
  %s3 = sld [smem:[#allocation0]]
  $region57: #{tpu_custom_call.1} parent=0
    _
  %s5 = ssub.s32 1, %s3
  %s6 = scalar_select 0, %s5, %s3
  $region1: #{tpu_custom_call.1} parent=0
    #allocation5 [shape = 'u8[8192]{0}', space=vmem, size = 0x2000, scoped, tag = 'input window, operand 0']
    #allocation6 [shape = 's32[2]{0}', space=sflag, size = 0x8, scoped, tag = 'scoped memory for tpu_custom_call.1']
    #allocation7 [shape = 'u8[2048]{0}', space=vmem, size = 0x800, scoped, tag = 'input window, operand 1']
    #allocation8 [shape = 's32[2]{0}', space=sflag, size = 0x8, scoped, tag = 'scoped memory for tpu_custom_call.1']
    %7 = vsyncpa [#allocation6], 0
    %s8 = scalar_lea.sflag [#allocation6], 1
    %9 = vsyncpa %s8, 0
    %10 = vsyncpa [#allocation8], 0
    %s11 = scalar_lea.sflag [#allocation8], 1
    %12 = vsyncpa %s11, 0
    loop: start=0, step=1, limit=4
    $region2: #{tpu_custom_call.1} parent=1 // loop_pre_header
      _
    $region3: #{tpu_custom_call.1} parent=1 // loop_header
      %s14 = sphi 0, %s18
      %p15 = scmp.ge.s32.totalorder %s14, 4
      %s21 = sphi 0, %s33
      %s22 = sphi 0, %s29
      %s23 = sphi 0, %s21
      %s24 = sphi 0, %s22
      %s25 = sphi 0, %s23
      %s26 = sphi 0, %s24
      %s38 = sphi 0, %s40
      %s41 = sphi 0, %s38
      %s42 = sphi 0, %s41
      %s58 = sphi 0, %s42
      %s66 = sphi 0, %s68
      %s69 = sphi 0, %s66
      %s70 = sphi 0, %s69
      %s86 = sphi 0, %s70
      %s92 = sphi 0, %s94
      %s95 = sphi 0, %s92
      %s96 = sphi 0, %s95
      %s112 = sphi 0, %s96
    $region4: #{tpu_custom_call.1} parent=1 // loop_header_branch
      %17 = sbr.rel (%p15) target = $region8
    $region5: #{tpu_custom_call.1} parent=1 // loop_body
      %s19 = ssub.s32 %s14, 1
      %s20 = ssub.s32 %s14, 2
      %s27 = sadd.s32 1, %s22
      %p28 = scmp.ge.s32.totalorder %s27, 1
      %s29 = scalar_select %p28, 0, %s27
      %s30 = sadd.s32 1, %s21
      %s31 = scalar_select %p28, %s30, %s21
      %p32 = scmp.ge.s32.totalorder %s31, 2
      %s33 = scalar_select %p32, 0, %s31
      %s34 = ssub.s32 %s21, %s33
      %s35 = ssub.s32 %s22, %s29
      %s36 = sor.u32 %s34, %s35
      %p37 = scmp.eq.s32.totalorder %s36, 0
      %s39 = sadd.s32 %s38, 1
      %s40 = scalar_select %p37, %s38, %s39
      %p43 = pneg %p37
      %p44 = scmp.eq.s32.totalorder %s14, 1
      %p45 = por %p43, %p44
      %p46 = scmp.ne.s32.totalorder %s38, %s41
      %p47 = scmp.eq.s32.totalorder %s14, 0
      %p48 = por %p46, %p47
      %p49 = scmp.ne.s32.totalorder %s38, %s41
      %p50 = scmp.eq.s32.totalorder %s19, 1
      %p51 = por %p49, %p50
      %p52 = scmp.ne.s32.totalorder %s41, %s42
      %p53 = scmp.eq.s32.totalorder %s19, 0
      %p54 = por %p52, %p53
      %p55 = scmp.ne.s32.totalorder %s41, %s42
      %p56 = scmp.eq.s32.totalorder %s20, 1
      %p57 = por %p55, %p56
      %p59 = scmp.ne.s32.totalorder %s42, %s58
      %p60 = scmp.eq.s32.totalorder %s20, 0
      %p61 = por %p59, %p60
      %s62 = ssub.s32 %s21, %s33
      %s63 = ssub.s32 %s22, %s29
      %s64 = sor.u32 %s62, %s63
      %p65 = scmp.eq.s32.totalorder %s64, 0
      %s67 = sadd.s32 %s66, 1
      %s68 = scalar_select %p65, %s66, %s67
      %p71 = pneg %p65
      %p72 = scmp.eq.s32.totalorder %s14, 1
      %p73 = por %p71, %p72
      %p74 = scmp.ne.s32.totalorder %s66, %s69
      %p75 = scmp.eq.s32.totalorder %s14, 0
      %p76 = por %p74, %p75
      %p77 = scmp.ne.s32.totalorder %s66, %s69
      %p78 = scmp.eq.s32.totalorder %s19, 1
      %p79 = por %p77, %p78
      %p80 = scmp.ne.s32.totalorder %s69, %s70
      %p81 = scmp.eq.s32.totalorder %s19, 0
      %p82 = por %p80, %p81
      %p83 = scmp.ne.s32.totalorder %s69, %s70
      %p84 = scmp.eq.s32.totalorder %s20, 1
      %p85 = por %p83, %p84
      %p87 = scmp.ne.s32.totalorder %s70, %s86
      %p88 = scmp.eq.s32.totalorder %s20, 0
      %p89 = por %p87, %p88
      %s90 = ssub.s32 %s21, %s33
      %p91 = scmp.eq.s32.totalorder %s90, 0
      %s93 = sadd.s32 %s92, 1
      %s94 = scalar_select %p91, %s92, %s93
      %p97 = pneg %p91
      %p98 = scmp.eq.s32.totalorder %s14, 1
      %p99 = por %p97, %p98
      %p100 = scmp.ne.s32.totalorder %s92, %s95
      %p101 = scmp.eq.s32.totalorder %s14, 0
      %p102 = por %p100, %p101
      %p103 = scmp.ne.s32.totalorder %s92, %s95
      %p104 = scmp.eq.s32.totalorder %s19, 1
      %p105 = por %p103, %p104
      %p106 = scmp.ne.s32.totalorder %s95, %s96
      %p107 = scmp.eq.s32.totalorder %s19, 0
      %p108 = por %p106, %p107
      %p109 = scmp.ne.s32.totalorder %s95, %s96
      %p110 = scmp.eq.s32.totalorder %s20, 1
      %p111 = por %p109, %p110
      %p113 = scmp.ne.s32.totalorder %s96, %s112
      %p114 = scmp.eq.s32.totalorder %s20, 0
      %p115 = por %p113, %p114
      %p116 = scmp.le.s32.totalorder 1, %s14
      %p117 = scmp.lt.s32.totalorder %s14, 3
      %p118 = pnand %p116, %p117
      %p119 = pneg %p118
      // Predicated region
      $region9: #{tpu_custom_call.1} parent=5 // pred_check
        _
      $region10: #{tpu_custom_call.1} parent=5 // pred_check_branch
        %121 = sbr.rel (%p118) target = $region12
      $region11: #{tpu_custom_call.1} parent=5 // pred_region
        %s122 = ssub.s32 %s14, 1
      $region12: #{tpu_custom_call.1} parent=5 // pred_fallthru
        _
      %p123 = scmp.lt.s32.totalorder %s14, 2
      // Predicated region
      $region13: #{tpu_custom_call.1} parent=5 // pred_check
        %p124 = pneg %p123
      $region14: #{tpu_custom_call.1} parent=5 // pred_check_branch
        %126 = sbr.rel (%p124) target = $region16
      $region15: #{tpu_custom_call.1} parent=5 // pred_region
        // Predicated region
        $region17: #{tpu_custom_call.1} parent=15 // pred_check
          %p127 = pneg %p48
        $region18: #{tpu_custom_call.1} parent=15 // pred_check_branch
          %129 = sbr.rel (%p127) target = $region20
        $region19: #{tpu_custom_call.1} parent=15 // pred_region
          %s130 = sand.u32 %s38, 1
          %s131 = scalar_lea.sflag [#allocation6], %s130
          %s132 = sand.u32 %s38, 1
          %s133 = smul.addr %s132, 8
          %s134 = scalar_lea.vmem [#allocation5], %s133
          %s135 = smul.u32 2, %s22
          %s137 = ssub.s32 128, 128
          %138 = vsyncadd %s131, %s137
          %s139 = smul.addr %s21, 2
          %s140 = sadd.s32 %s135, %s139
          %s141 = smul.addr %s140, 64
          %s142 = scalar_lea.hbm %s0, %s141
          %s144 = sshll.u32 %s134, 4
          %s145 = int_to_ptr.vmem [resolvable:$true] %s144
          %147 = dma.hbm_to_vmem [thread:$0]  %s142, 128, %s145, %s131
        $region20: #{tpu_custom_call.1} parent=15 // pred_fallthru
          _
        // Predicated region
        $region21: #{tpu_custom_call.1} parent=15 // pred_check
          %p148 = pneg %p76
        $region22: #{tpu_custom_call.1} parent=15 // pred_check_branch
          %150 = sbr.rel (%p148) target = $region24
        $region23: #{tpu_custom_call.1} parent=15 // pred_region
          %s151 = sand.u32 %s66, 1
          %s152 = scalar_lea.sflag [#allocation8], %s151
          %s153 = sand.u32 %s66, 1
          %s154 = smul.addr %s153, 2
          %s155 = scalar_lea.vmem [#allocation7], %s154
          %s156 = smul.u32 2, %s22
          %s158 = ssub.s32 32, 32
          %159 = vsyncadd %s152, %s158
          %s160 = smul.addr %s21, 2
          %s161 = sadd.s32 %s156, %s160
          %s162 = smul.addr %s161, 16
          %s163 = scalar_lea.hbm %s1, %s162
          %s165 = sshll.u32 %s155, 4
          %s166 = int_to_ptr.vmem [resolvable:$true] %s165
          %168 = dma.hbm_to_vmem [thread:$0]  %s163, 32, %s166, %s152
        $region24: #{tpu_custom_call.1} parent=15 // pred_fallthru
          _
      $region16: #{tpu_custom_call.1} parent=5 // pred_fallthru
        _
      %p169 = scmp.le.s32.totalorder 1, %s14
      %p170 = scmp.lt.s32.totalorder %s14, 3
      %p171 = pnand %p169, %p170
      %p172 = pneg %p171
      // Predicated region
      $region25: #{tpu_custom_call.1} parent=5 // pred_check
        _
      $region26: #{tpu_custom_call.1} parent=5 // pred_check_branch
        %174 = sbr.rel (%p171) target = $region28
      $region27: #{tpu_custom_call.1} parent=5 // pred_region
        %s175 = ssub.s32 %s14, 1
        %s176 = sand.u32 %s41, 1
        %s177 = scalar_lea.sflag [#allocation6], %s176
        %s178 = sand.u32 %s41, 1
        %s179 = smul.addr %s178, 8
        %s180 = scalar_lea.vmem [#allocation5], %s179
        // Predicated region
        $region29: #{tpu_custom_call.1} parent=27 // pred_check
          %p181 = pneg %p54
        $region30: #{tpu_custom_call.1} parent=27 // pred_check_branch
          %183 = sbr.rel (%p181) target = $region32
        $region31: #{tpu_custom_call.1} parent=27 // pred_region
          %184 = dma.done %s177, 128
        $region32: #{tpu_custom_call.1} parent=27 // pred_fallthru
          _
        %s185 = sand.u32 %s69, 1
        %s186 = scalar_lea.sflag [#allocation8], %s185
        %s187 = sand.u32 %s69, 1
        %s188 = smul.addr %s187, 2
        %s189 = scalar_lea.vmem [#allocation7], %s188
        // Predicated region
        $region33: #{tpu_custom_call.1} parent=27 // pred_check
          %p190 = pneg %p82
        $region34: #{tpu_custom_call.1} parent=27 // pred_check_branch
          %192 = sbr.rel (%p190) target = $region36
        $region35: #{tpu_custom_call.1} parent=27 // pred_region
          %193 = dma.done %s186, 32
        $region36: #{tpu_custom_call.1} parent=27 // pred_fallthru
          _
        %s194 = sand.u32 %s41, 1
        %s195 = scalar_lea.sflag [#allocation6], %s194
        %s196 = sand.u32 %s41, 1
        %s197 = smul.addr %s196, 8
        %s198 = scalar_lea.vmem [#allocation5], %s197
        %p199 = pneg %p54
        %p200 = pneg %p51
        %s201 = sand.u32 %s69, 1
        %s202 = scalar_lea.sflag [#allocation8], %s201
        %s203 = sand.u32 %s69, 1
        %s204 = smul.addr %s203, 2
        %s205 = scalar_lea.vmem [#allocation7], %s204
        %p206 = pneg %p82
        %p207 = pneg %p79
        %p208 = pneg %p108
        %p209 = pneg %p105
        %p210 = scmp.lt.s32.totalorder %s23, 1
        %s211 = scalar_select %p210, %s23, 1
        %s212 = smul.addr %s211, 4
        %s213 = scalar_lea.vmem %s2, %s212
        %s214 = smul.u32 2, %s24
        %s215 = smul.u32 2, %s24
        %p216 = scmp.lt.s32.totalorder %s23, 1
        %s217 = scalar_select %p216, %s23, 1
        %s218 = smul.addr %s217, 4
        %s219 = scalar_lea.vmem %s2, %s218
        %p220 = scmp.eq.s32.totalorder %s24, 0
        // Predicated region
        $region37: #{tpu_custom_call.1} parent=27 // pred_check
          %p221 = pneg %p220
        $region38: #{tpu_custom_call.1} parent=27 // pred_check_branch
          %223 = sbr.rel (%p221) target = $region40
        $region39: #{tpu_custom_call.1} parent=27 // pred_region
          %vm224 = vcmask 3072
          %225 = vst.msk [vmem:[#allocation2] sm:$0xf] %vm224, 0.0
          %226 = vst.msk [vmem:[#allocation3] sm:$0xf] %vm224, 0.0
          %227 = vst.msk [vmem:[#allocation4] sm:$0xf] %vm224, 0.0
        $region40: #{tpu_custom_call.1} parent=27 // pred_fallthru
          _
        %v228 = vld [vmem:[%s180] sm:$0xff]
        %v229 = vld [vmem:[%s189] sm:$0x3]
        %v230 = vlaneseq
        %v231 = vshrl.u32 %v230, 7
        %v232 = vlaneseq
        %v233 = vshrl.u32 %v232, 7
        %v234 = vsub.s32 0, %v233
        %v235 = vrot.slane %v229, %v234
        %v236 = vlaneseq
        %v237 = vshrl.u32 %v236, 7
        %v238 = vsub.s32 1, %v237
        %v239 = vrot.slane %v229, %v238
        %vm240 = vcmp.eq.s32.totalorder %v235, %v231
        %vm241 = vcmp.eq.s32.totalorder %v239, %v231
        %v242 = vsel %vm240, 1, 0
        %v243 = vsel %vm241, 1, 0
        %v244 = vcvt.s32.f32 %v242
        %v245 = vcvt.s32.f32 %v243
        %v247 = vcombine.high %v228, %v228
        %v249 = vsel %vm240, %v228, 0.0
        %v250 = vsel %vm241, %v247, 0.0
        %v251 = vld [vmem:[#allocation2] sm:$0xf]
        %vm252 = vcmask 1043456
        %v253 = vsel %vm252, %v228, 0.0
        %v254 = vsel %vm252, %v247, 0.0
        %v255 = vadd.f32 %v253, %v254
        %256 = vadd.xlane.f32.xlu0 %v255
        %v257 = vpop.xlane.xlu0 %256
        %v258 = vadd.f32 %v251, %v257
        %vm259 = vcmask 3072
        %260 = vst.msk [vmem:[#allocation2] sm:$0xf] %vm259, %v258
        %v261 = vld [vmem:[#allocation3] sm:$0xf]
        %v262 = vsel %vm252, %v244, 0.0
        %v263 = vsel %vm252, %v245, 0.0
        %v264 = vadd.f32 %v262, %v263
        %265 = vadd.xlane.f32.xlu0 %v264
        %v266 = vpop.xlane.xlu0 %265
        %v267 = vadd.f32 %v261, %v266
        %268 = vst.msk [vmem:[#allocation3] sm:$0xf] %vm259, %v267
        %v269 = vld [vmem:[#allocation4] sm:$0xf]
        %v270 = vsel %vm252, %v249, 0.0
        %v271 = vsel %vm252, %v250, 0.0
        %v272 = vadd.f32 %v270, %v271
        %273 = vadd.xlane.f32.xlu0 %v272
        %v274 = vpop.xlane.xlu0 %273
        %v275 = vadd.f32 %v269, %v274
        %276 = vst.msk [vmem:[#allocation4] sm:$0xf] %vm259, %v275
        // Predicated region
        $region41: #{tpu_custom_call.1} parent=27 // pred_check
          %p277 = pneg %p220
        $region42: #{tpu_custom_call.1} parent=27 // pred_check_branch
          %279 = sbr.rel (%p277) target = $region44
        $region43: #{tpu_custom_call.1} parent=27 // pred_region
          %v280 = vld [vmem:[#allocation2] sm:$0xf]
          %v281 = vld [vmem:[#allocation3] sm:$0xf]
          %v282 = vld [vmem:[#allocation4] sm:$0xf]
          %v283 = vmul.f32 %v282, 2.0
          %v284 = vadd.f32 %v283, 1.0
          %v285 = vadd.f32 %v280, %v281
          %v286 = vadd.f32 %v285, 1.0
          %v287 = vrcp.pop %v286
          %v288 = vmul.f32 %v284, %v287
          %289 = vst.msk [vmem:[%s219] sm:$0xf] %vm259, %v288
        $region44: #{tpu_custom_call.1} parent=27 // pred_fallthru
          _
        %p290 = scmp.lt.s32.totalorder %s23, 1
        %s291 = scalar_select %p290, %s23, 1
        %s292 = smul.addr %s291, 4
        %s293 = scalar_lea.vmem %s2, %s292
        // Predicated region
        $region45: #{tpu_custom_call.1} parent=27 // pred_check
          %p294 = pneg %p105
        $region46: #{tpu_custom_call.1} parent=27 // pred_check_branch
          %296 = sbr.rel (%p294) target = $region48
        $region47: #{tpu_custom_call.1} parent=27 // pred_region
          _
        $region48: #{tpu_custom_call.1} parent=27 // pred_fallthru
          _
      $region28: #{tpu_custom_call.1} parent=5 // pred_fallthru
        _
      %p297 = scmp.le.s32.totalorder 2, %s14
      // Predicated region
      $region49: #{tpu_custom_call.1} parent=5 // pred_check
        %p298 = pneg %p297
      $region50: #{tpu_custom_call.1} parent=5 // pred_check_branch
        %300 = sbr.rel (%p298) target = $region52
      $region51: #{tpu_custom_call.1} parent=5 // pred_region
        %s301 = ssub.s32 %s14, 2
        // Predicated region
        $region53: #{tpu_custom_call.1} parent=51 // pred_check
          %p302 = pneg %p111
        $region54: #{tpu_custom_call.1} parent=51 // pred_check_branch
          %304 = sbr.rel (%p302) target = $region56
        $region55: #{tpu_custom_call.1} parent=51 // pred_region
          %p305 = scmp.lt.s32.totalorder %s25, 1
          %s306 = scalar_select %p305, %s25, 1
          %s307 = smul.addr %s306, 4
          %s308 = scalar_lea.vmem %s2, %s307
        $region56: #{tpu_custom_call.1} parent=51 // pred_fallthru
          _
      $region52: #{tpu_custom_call.1} parent=5 // pred_fallthru
        _
    $region6: #{tpu_custom_call.1} parent=1 // loop_footer
      %s18 = sadd.s32 1, %s14
    $region7: #{tpu_custom_call.1} parent=1 // loop_footer_branch
      %13 = sbr.rel target = $region3
    $region8: #{tpu_custom_call.1} parent=1 // loop_exit
      _
    %309 = vsyncpa [#allocation6], 1
    %s310 = scalar_lea.sflag [#allocation6], 1
    %311 = vsyncpa %s310, 1
    %312 = vsyncpa [#allocation8], 1
    %s313 = scalar_lea.sflag [#allocation8], 1
    %314 = vsyncpa %s313, 1

</llo_original>
